<compile_context>
chip_gen: v7x
topology: tpu7x:2x2x1
jax: 0.10.0
libtpu: 0.0.40
codegen_flags: <defaults>
</compile_context>

<pallas_src>
import functools

import jax
import jax.numpy as jnp
from jax.experimental import pallas as pl
from jax.experimental.pallas import tpu as pltpu


_NEG_BIG = -3.0e38  # finite sentinel for masked max (bf16/f32 representable)


def _round_up(v, m):
    return (v + m - 1) // m * m


@functools.lru_cache(maxsize=1)
def _compiler_params():
    """Generation-aware VMEM cap: ~3/4 of physical, never above 96 MiB."""
    try:
        cap = int(pltpu.get_tpu_info().vmem_capacity_bytes)
    except Exception:
        cap = 64 * 1024 * 1024
    limit = int(min(cap * 3 // 4, 96 * 1024 * 1024))
    return pltpu.CompilerParams(
        dimension_semantics=("parallel", "arbitrary"),
        vmem_limit_bytes=limit,
    )


def _extract_col(v, col):
    """Single column of a 2-D value as (rows, 1) via a lane mask + reduce.

    Avoids a non-128-aligned lane slice; only uses ops already exercised
    elsewhere in the kernel.  Finalize-only, so cost is irrelevant.
    """
    lane = jax.lax.broadcasted_iota(jnp.int32, v.shape, 1)
    return jnp.sum(jnp.where(lane == col, v, 0.0), axis=1, keepdims=True)


# ---------------------------------------------------------------------------
# Kernel
# ---------------------------------------------------------------------------

def _readout_kernel(*refs, op, tb, h, h_pad, nc, fold_cnt):
    need_sum = op in ("add", "mean", "mema")
    need_max = op in ("max", "mema")
    need_cnt = (op == "max") or (op in ("mean", "mema") and not fold_cnt)
    mema = op == "mema"

    it = iter(refs)
    batch_row_ref = next(it)                        # (1, tn) int32
    batch_col_ref = next(it) if need_max else None  # (tn, 1) int32
    x_ref = next(it)                                # (tn, h_pad) bf16
    w_ref = next(it) if mema else None              # (2*h_pad, h_pad) bf16
    bias_ref = next(it) if mema else None           # (1, h_pad) f32
    o_ref = next(it)                                # (tb, h_pad) f32
    sum_ref = next(it) if need_sum else None        # (tb, h_pad) f32 scratch
    max_ref = next(it) if need_max else None        # (tb, h_pad) f32 scratch
    cnt_ref = next(it) if need_cnt else None        # (tb, 1)     f32 scratch

    b = pl.program_id(0)            # graph-tile index (parallel axis)
    k = pl.program_id(1)            # node-tile index (reduction axis)
    tn = x_ref.shape[0]
    base = b * tb

    @pl.when(k == 0)
    def _init():
        if need_sum:
            sum_ref[...] = jnp.zeros_like(sum_ref)
        if need_max:
            max_ref[...] = jnp.full_like(max_ref, _NEG_BIG)
        if need_cnt:
            cnt_ref[...] = jnp.zeros_like(cnt_ref)

    # ---- sum / count accumulation (MXU one-hot matmul) --------------------
    if need_sum or need_cnt:
        batch_row = batch_row_ref[...]                                # (1, tn)
        row_ids = jax.lax.broadcasted_iota(jnp.int32, (tb, tn), 0) + base
        mask = row_ids == batch_row                                   # (tb, tn)
        if need_sum:
            x = x_ref[...]                                            # (tn, h_pad)
            sum_ref[...] += jnp.dot(mask.astype(x.dtype), x,
                                    preferred_element_type=jnp.float32)
        if need_cnt:
            cnt_ref[...] += jnp.sum(mask.astype(jnp.float32), axis=1,
                                    keepdims=True)

    # ---- max accumulation (chunked masked reduce, bounded live temp) ------
    if need_max:
        neg = jnp.float32(_NEG_BIG)
        for c0 in range(0, tn, nc):                       # static node chunks
            xc = x_ref[c0:c0 + nc, :].astype(jnp.float32)         # (nc, h_pad)
            bcc = batch_col_ref[c0:c0 + nc, :]                     # (nc, 1)
            for g in range(tb):                           # static graph rows
                sel = bcc == (base + g)                            # (nc, 1)
                part = jnp.max(jnp.where(sel, xc, neg), axis=0, keepdims=True)
                max_ref[g:g + 1, :] = jnp.maximum(max_ref[g:g + 1, :], part)

    # ---- finalize ----------------------------------------------------------
    @pl.when(k == pl.num_programs(1) - 1)
    def _finalize():
        if op == "add":
            o_ref[...] = sum_ref[...]
        elif op == "mean":
            s = sum_ref[...]
            cnt = _extract_col(s, h) if fold_cnt else cnt_ref[...]
            o_ref[...] = s * pl.reciprocal(jnp.maximum(cnt, 1.0))
        elif op == "max":
            # Empty graphs (cnt == 0) produce 0.0 (matches scatter-max default).
            o_ref[...] = jnp.where(cnt_ref[...] > 0.0, max_ref[...], 0.0)
        else:  # mema
            s = sum_ref[...]
            cnt = _extract_col(s, h) if fold_cnt else cnt_ref[...]
            inv = pl.reciprocal(jnp.maximum(cnt, 1.0))
            mean_pool = (s * inv).astype(jnp.bfloat16)
            max_pool = jnp.where(cnt > 0.0, max_ref[...], 0.0).astype(jnp.bfloat16)
            w = w_ref[...]                                  # (2*h_pad, h_pad)
            out = (jnp.dot(mean_pool, w[:h_pad, :],
                           preferred_element_type=jnp.float32)
                   + jnp.dot(max_pool, w[h_pad:, :],
                             preferred_element_type=jnp.float32)
                   + bias_ref[...])
            o_ref[...] = out


# ---------------------------------------------------------------------------
# Wrapper
# ---------------------------------------------------------------------------

def _pool_pallas(x, batch, num_graphs, op, w_pad=None, bias_pad=None,
                 compute_dtype=jnp.bfloat16):
    n, h = x.shape
    need_max = op in ("max", "mema")
    mema = op == "mema"

    h_pad = _round_up(h, 128)
    fold_cnt = h < h_pad                        # free padding column for counts
    tn = min(1024 if need_max else 2048, _round_up(max(n, 1), 128))
    n_pad = _round_up(max(n, 1), tn)
    b8 = _round_up(max(num_graphs, 1), 8)
    # Large graph tiles for the MXU path (often collapses the graph axis so x
    # streams once); bounded tiles for the statically-unrolled max path.
    tb = min(b8, 16 if need_max else 512)
    b_pad = _round_up(b8, tb)
    nb, nk = b_pad // tb, n_pad // tn
    nc = min(tn, 128)                           # node chunk for the max path

    # Padded, lane-dense inputs; x streamed as bf16 (f32 accumulation in-kernel).
    x_p = jnp.zeros((n_pad, h_pad), compute_dtype)
    x_p = x_p.at[:n, :h].set(x.astype(compute_dtype))
    if fold_cnt:
        # Fold node counts into the MXU matmul: ones in the first pad column.
        x_p = x_p.at[:n, h].set(1.0)
    batch_i = batch.astype(jnp.int32)
    # Padded nodes get graph id -1: never matches any graph row in the kernel.
    batch_row = jnp.full((1, n_pad), -1, jnp.int32).at[0, :n].set(batch_i)

    in_specs = [pl.BlockSpec((1, tn), lambda b, k: (0, k))]
    args = [batch_row]
    if need_max:
        batch_col = jnp.full((n_pad, 1), -1, jnp.int32).at[:n, 0].set(batch_i)
        in_specs.append(pl.BlockSpec((tn, 1), lambda b, k: (k, 0)))
        args.append(batch_col)
    in_specs.append(pl.BlockSpec((tn, h_pad), lambda b, k: (k, 0)))
    args.append(x_p)
    if mema:
        in_specs.append(pl.BlockSpec((2 * h_pad, h_pad), lambda b, k: (0, 0)))
        args.append(w_pad)
        in_specs.append(pl.BlockSpec((1, h_pad), lambda b, k: (0, 0)))
        args.append(bias_pad)

    scratch = []
    if op in ("add", "mean", "mema"):
        scratch.append(pltpu.VMEM((tb, h_pad), jnp.float32))   # running sum
    if need_max:
        scratch.append(pltpu.VMEM((tb, h_pad), jnp.float32))   # running max
    need_cnt = (op == "max") or (op in ("mean", "mema") and not fold_cnt)
    if need_cnt:
        scratch.append(pltpu.VMEM((tb, 1), jnp.float32))       # counts

    grid_spec = pltpu.PrefetchScalarGridSpec(
        num_scalar_prefetch=0,
        grid=(nb, nk),
        in_specs=in_specs,
        out_specs=pl.BlockSpec((tb, h_pad), lambda b, k: (b, 0)),
        scratch_shapes=scratch,
    )
    out = pl.pallas_call(
        functools.partial(_readout_kernel, op=op, tb=tb, h=h, h_pad=h_pad,
                          nc=nc, fold_cnt=fold_cnt),
        out_shape=jax.ShapeDtypeStruct((b_pad, h_pad), jnp.float32),
        grid_spec=grid_spec,
        compiler_params=_compiler_params(),
    )(*args)
    return out[:num_graphs, :h]


class ReadoutFunc:
    """JAX/Pallas port of Readout_func (mean / max / add / none / mema)."""

    def __init__(self, readout_op, hidden, key=None):
        self.readout_op = readout_op
        self.hidden = hidden
        if readout_op == "mema":
            # nn.Linear(hidden*2, hidden), stored pre-transposed as [2H, H].
            key = key if key is not None else jax.random.PRNGKey(42)
            k_w, k_b = jax.random.split(key)
            bound = 1.0 / float(hidden * 2) ** 0.5
            self.w_t = jax.random.uniform(
                k_w, (hidden * 2, hidden), jnp.float32, -bound, bound)
            self.b = jax.random.uniform(
                k_b, (1, hidden), jnp.float32, -bound, bound)
            # Lane-dense padded bf16 copy for the kernel (mean rows at 0, max
            # rows at h_pad, zero rows elsewhere so padded columns are inert).
            h_pad = _round_up(hidden, 128)
            w_pad = jnp.zeros((2 * h_pad, h_pad), jnp.bfloat16)
            w_pad = w_pad.at[:hidden, :hidden].set(
                self.w_t[:hidden].astype(jnp.bfloat16))
            w_pad = w_pad.at[h_pad:h_pad + hidden, :hidden].set(
                self.w_t[hidden:].astype(jnp.bfloat16))
            self.w_pad = w_pad
            self.bias_pad = jnp.zeros((1, h_pad), jnp.float32).at[:, :hidden].set(self.b)
        elif readout_op in ("att", "set2set", "sort"):
            # TODO(synk): att / set2set / sort readouts not implemented in Pallas.
            raise NotImplementedError(
                f"readout_op={readout_op!r} not implemented in Pallas port")

    def __call__(self, x, batch, num_graphs):
        x = x.astype(jnp.float32)
        h = x.shape[1]
        if self.readout_op == "none":
            # global_mean_pool(x, batch).mul(0.0) is identically zero.
            return jnp.zeros((num_graphs, h), jnp.float32)
        if self.readout_op in ("mean", "max", "add"):
            return _pool_pallas(x, batch, num_graphs, self.readout_op)
        if self.readout_op == "mema":
            return _pool_pallas(x, batch, num_graphs, "mema",
                                w_pad=self.w_pad, bias_pad=self.bias_pad)
        raise NotImplementedError(self.readout_op)


# ---------------------------------------------------------------------------
# Reference (pure JAX) for a quick self-check
# ---------------------------------------------------------------------------

def _ref(readout_op, x, batch, num_graphs, module, compute_dtype=jnp.bfloat16):
    # The kernel streams x (and mema W) in bf16 with f32 accumulation; compare
    # against a reference using the same rounded operands so the check
    # isolates pooling/linear logic rather than the documented bf16 choice.
    xr = x.astype(compute_dtype).astype(jnp.float32)
    seg_sum = jax.ops.segment_sum(xr, batch, num_segments=num_graphs)
    cnt = jax.ops.segment_sum(jnp.ones((x.shape[0], 1), jnp.float32), batch,
                              num_segments=num_graphs)
    seg_mean = seg_sum / jnp.maximum(cnt, 1.0)
    seg_max = jnp.where(cnt > 0.0,
                        jax.ops.segment_max(xr, batch, num_segments=num_graphs),
                        0.0)
    if readout_op == "mean":
        return seg_mean
    if readout_op == "add":
        return seg_sum
    if readout_op == "max":
        return seg_max
    if readout_op == "none":
        return seg_mean * 0.0
    if readout_op == "mema":
        cat = jnp.concatenate([seg_mean, seg_max], axis=-1)
        cat = cat.astype(jnp.bfloat16).astype(jnp.float32)
        w = module.w_t.astype(jnp.bfloat16).astype(jnp.float32)
        return cat @ w + module.b
    raise NotImplementedError(readout_op)


# ---------------------------------------------------------------------------
# Main
# ---------------------------------------------------------------------------

if __name__ == "__main__":
    key = jax.random.PRNGKey(0)
    k_x, k_w = jax.random.split(key)

    hidden = 32
    num_nodes = 64
    num_graphs = 4

    x = jax.random.normal(k_x, (num_nodes, hidden), dtype=jnp.float32)
    batch = jnp.repeat(jnp.arange(num_graphs, dtype=jnp.int32),
                       num_nodes // num_graphs)

    ok = True
    for op in ("mean", "max", "add", "none", "mema"):
        mod = ReadoutFunc(op, hidden, key=k_w)
        out = mod(x, batch, num_graphs)
        out = jax.block_until_ready(out)
        ref = _ref(op, x, batch, num_graphs, mod)
        if not jnp.allclose(out, ref, atol=2e-3, rtol=2e-3):
            ok = False
            print(f"MISMATCH for op={op}: max err "
                  f"{float(jnp.max(jnp.abs(out - ref)))}")

    if ok:
        print("KERNEL_OK")
</pallas_src>

<mosaic_0001>
module attributes {stable_mosaic.version = 11 : i64} {
  func.func @_readout_kernel(%arg0: i32, %arg1: i32, %arg2: memref<1x128xi32, #tpu.memory_space<vmem>>, %arg3: memref<128x128xbf16, #tpu.memory_space<vmem>>, %arg4: memref<8x128xf32, #tpu.memory_space<vmem>>, %arg5: memref<8x128xf32, #tpu.memory_space<vmem>>) attributes {dimension_semantics = [#tpu.dimension_semantics<parallel>, #tpu.dimension_semantics<arbitrary>], iteration_bounds = array<i64: 1, 1>, scalar_prefetch = 0 : i64, scratch_operands = 1 : i64, tpu.core_type = #tpu.core_type<tc>, window_params = [{transform_indices = @transform_0, window_bounds = array<i64: 1, 128>}, {transform_indices = @transform_1, window_bounds = array<i64: 128, 128>}, {transform_indices = @transform_2, window_bounds = array<i64: 8, 128>}]} {
    %c8_i32 = arith.constant 8 : i32
    %0 = arith.muli %arg0, %c8_i32 : i32
    %c0_i32 = arith.constant 0 : i32
    %1 = arith.cmpi eq, %arg1, %c0_i32 : i32
    %2 = arith.extui %1 : i1 to i32
    %c0_i32_0 = arith.constant 0 : i32
    %3 = arith.cmpi ne, %2, %c0_i32_0 : i32
    scf.if %3 {
      %cst_10 = arith.constant 0.000000e+00 : f32
      %21 = vector.broadcast %cst_10 : f32 to vector<8x128xf32>
      %c0_11 = arith.constant 0 : index
      %c0_12 = arith.constant 0 : index
      %22 = vector.load %arg5[%c0_11, %c0_12] : memref<8x128xf32, #tpu.memory_space<vmem>>, vector<8x128xf32>
      tpu.vector_store %arg5[%c0_11, %c0_12], %21 {strides = array<i32>} : memref<8x128xf32, #tpu.memory_space<vmem>>, vector<8x128xf32>,
    } else {
    }
    %c0 = arith.constant 0 : index
    %c0_1 = arith.constant 0 : index
    %4 = vector.load %arg2[%c0, %c0_1] : memref<1x128xi32, #tpu.memory_space<vmem>>, vector<1x128xi32>
    %5 = tpu.iota {dimensions = array<i32: 0>} : vector<8x128xi32>
    %6 = vector.broadcast %0 : i32 to vector<8x128xi32>
    %7 = arith.addi %5, %6 : vector<8x128xi32>
    %8 = vector.broadcast %4 : vector<1x128xi32> to vector<8x128xi32>
    %9 = arith.cmpi eq, %7, %8 : vector<8x128xi32>
    %c0_2 = arith.constant 0 : index
    %c0_3 = arith.constant 0 : index
    %10 = vector.load %arg3[%c0_2, %c0_3] : memref<128x128xbf16, #tpu.memory_space<vmem>>, vector<128x128xbf16>
    %c0_4 = arith.constant 0 : index
    %c0_5 = arith.constant 0 : index
    %11 = vector.load %arg5[%c0_4, %c0_5] : memref<8x128xf32, #tpu.memory_space<vmem>>, vector<8x128xf32>
    %12 = arith.extui %9 : vector<8x128xi1> to vector<8x128xi32>
    %13 = arith.sitofp %12 : vector<8x128xi32> to vector<8x128xf32>
    %14 = arith.truncf %13 : vector<8x128xf32> to vector<8x128xbf16>
    %cst = arith.constant dense<0.000000e+00> : vector<8x128xf32>
    %15 = tpu.matmul %14, %10, %cst {dimension_numbers = #tpu.dot_dimension_numbers<[1], [0], [0], [1], [0, 0, 1, 1], [], []>} : vector<8x128xbf16>, vector<128x128xbf16>, vector<8x128xf32> -> vector<8x128xf32>
    %16 = arith.addf %11, %15 : vector<8x128xf32>
    %c0_6 = arith.constant 0 : index
    %c0_7 = arith.constant 0 : index
    %17 = vector.load %arg5[%c0_6, %c0_7] : memref<8x128xf32, #tpu.memory_space<vmem>>, vector<8x128xf32>
    tpu.vector_store %arg5[%c0_6, %c0_7], %16 {strides = array<i32>} : memref<8x128xf32, #tpu.memory_space<vmem>>, vector<8x128xf32>,
    %c0_i32_8 = arith.constant 0 : i32
    %18 = arith.cmpi eq, %arg1, %c0_i32_8 : i32
    %19 = arith.extui %18 : i1 to i32
    %c0_i32_9 = arith.constant 0 : i32
    %20 = arith.cmpi ne, %19, %c0_i32_9 : i32
    scf.if %20 {
      %c0_10 = arith.constant 0 : index
      %c0_11 = arith.constant 0 : index
      %21 = vector.load %arg5[%c0_10, %c0_11] : memref<8x128xf32, #tpu.memory_space<vmem>>, vector<8x128xf32>
      %22 = tpu.iota {dimensions = array<i32: 1>} : vector<8x128xi32>
      %c32_i32 = arith.constant 32 : i32
      %23 = vector.broadcast %c32_i32 : i32 to vector<8x128xi32>
      %24 = arith.cmpi eq, %22, %23 : vector<8x128xi32>
      %cst_12 = arith.constant 0.000000e+00 : f32
      %25 = vector.broadcast %cst_12 : f32 to vector<8x128xf32>
      %26 = arith.select %24, %21, %25 : vector<8x128xi1>, vector<8x128xf32>
      %cst_13 = arith.constant dense<0.000000e+00> : vector<8xf32>
      %27 = vector.multi_reduction <add>, %26, %cst_13 [1] : vector<8x128xf32> to vector<8xf32>
      %28 = vector.shape_cast %27 : vector<8xf32> to vector<8x1xf32>
      %cst_14 = arith.constant 1.000000e+00 : f32
      %29 = vector.broadcast %cst_14 : f32 to vector<8x1xf32>
      %30 = arith.maximumf %28, %29 : vector<8x1xf32>
      %31 = tpu.reciprocal %30 : vector<8x1xf32> -> vector<8x1xf32>
      %32 = vector.broadcast %31 : vector<8x1xf32> to vector<8x128xf32>
      %33 = arith.mulf %21, %32 : vector<8x128xf32>
      %c0_15 = arith.constant 0 : index
      %c0_16 = arith.constant 0 : index
      %34 = vector.load %arg4[%c0_15, %c0_16] : memref<8x128xf32, #tpu.memory_space<vmem>>, vector<8x128xf32>
      tpu.vector_store %arg4[%c0_15, %c0_16], %33 {strides = array<i32>} : memref<8x128xf32, #tpu.memory_space<vmem>>, vector<8x128xf32>,
    } else {
    }
    return
  }
  func.func @transform_0(%arg0: i32, %arg1: i32) -> (i32, i32) {
    %c0_i32 = arith.constant 0 : i32
    %c0_i32_0 = arith.constant 0 : i32
    return %c0_i32, %arg1 : i32, i32
  }
  func.func @transform_1(%arg0: i32, %arg1: i32) -> (i32, i32) {
    %c0_i32 = arith.constant 0 : i32
    %c0_i32_0 = arith.constant 0 : i32
    return %arg1, %c0_i32 : i32, i32
  }
  func.func @transform_2(%arg0: i32, %arg1: i32) -> (i32, i32) {
    %c0_i32 = arith.constant 0 : i32
    %c0_i32_0 = arith.constant 0 : i32
    return %arg0, %c0_i32 : i32, i32
  }
}

</mosaic_0001>

<llo_original>
// kernel: tpu_custom_call.1
$region0: #{tpu_custom_call.1}
  #allocation0 [shape = 'u32[]', space=smem, size = 0x4, offset = 0x4, fixed_abs, tag = 'smem constant byte address 0x4 - core index']
  #allocation1 [shape = 'u32[144,128]{1,0:T(1,128)}', space=vmem, size = 0x12000, scoped, tag = 'internal scratch']
  #allocation2 [shape = 'f32[8,128]{1,0:T(8,128)}', space=vmem, size = 0x1000, scoped, tag = 'scratch operand']
  %s0 = inlined_call_operand.hbm [shape: s32[1,128], index: 0, kind: input, shape index: {}]
  %s1 = inlined_call_operand.hbm [shape: bf16[128,128], index: 1, kind: input, shape index: {}]
  %s2 = inlined_call_operand.hbm [shape: f32[8,128], index: 2, kind: output, shape index: {}]
  %s3 = sld [smem:[#allocation0]]
  $region34: #{tpu_custom_call.1} parent=0
    _
  %s5 = ssub.s32 1, %s3
  %s6 = scalar_select 0, %s5, %s3
  $region1: #{tpu_custom_call.1} parent=0
    #allocation3 [shape = 'u8[512]{0}', space=vmem, size = 0x400, scoped, tag = 'input window, operand 0, single buffered']
    #allocation4 [shape = 's32[1]{0}', space=sflag, size = 0x4, scoped, tag = 'scoped memory for tpu_custom_call.1']
    #allocation5 [shape = 's32[1]{0}', space=sflag, size = 0x4, scoped, tag = 'scoped memory for tpu_custom_call.1']
    #allocation6 [shape = 'u8[32768]{0}', space=vmem, size = 0x8000, scoped, tag = 'input window, operand 1, single buffered']
    #allocation7 [shape = 's32[1]{0}', space=sflag, size = 0x4, scoped, tag = 'scoped memory for tpu_custom_call.1']
    #allocation8 [shape = 'u8[4096]{0}', space=vmem, size = 0x1000, scoped, tag = 'output window, operand 0, single buffered']
    %7 = vsyncpa [#allocation4], 0
    %8 = vsyncpa [#allocation7], 0
    %9 = vsyncpa [#allocation5], 0
    // Predicated region
    $region2: #{tpu_custom_call.1} parent=1 // pred_check
      _
    $region3: #{tpu_custom_call.1} parent=1 // pred_check_branch
      %11 = sbr.rel (0) target = $region5
    $region4: #{tpu_custom_call.1} parent=1 // pred_region
      %s13 = ssub.s32 16, 16
      %14 = vsyncadd [#allocation4], %s13
      %s16 = sshll.u32 [#allocation3], 4
      %s17 = int_to_ptr.vmem [resolvable:$true] %s16
      %19 = dma.hbm_to_vmem [thread:$0]  %s0, 16, %s17, [#allocation4]
    $region5: #{tpu_custom_call.1} parent=1 // pred_fallthru
      _
    // Predicated region
    $region6: #{tpu_custom_call.1} parent=1 // pred_check
      _
    $region7: #{tpu_custom_call.1} parent=1 // pred_check_branch
      %21 = sbr.rel (0) target = $region9
    $region8: #{tpu_custom_call.1} parent=1 // pred_region
      %s23 = ssub.s32 1024, 1024
      %24 = vsyncadd [#allocation7], %s23
      %s25 = sshll.u32 [#allocation6], 4
      %s26 = int_to_ptr.vmem [resolvable:$true] %s25
      %31 = dma.hbm_to_vmem [thread:$0]  %s1, 1024, %s26, [#allocation7], 64, 64, 4
    $region9: #{tpu_custom_call.1} parent=1 // pred_fallthru
      _
    // Predicated region
    $region10: #{tpu_custom_call.1} parent=1 // pred_check
      _
    $region11: #{tpu_custom_call.1} parent=1 // pred_check_branch
      %33 = sbr.rel (0) target = $region13
    $region12: #{tpu_custom_call.1} parent=1 // pred_region
      %34 = dma.done [#allocation4], 16
    $region13: #{tpu_custom_call.1} parent=1 // pred_fallthru
      _
    // Predicated region
    $region14: #{tpu_custom_call.1} parent=1 // pred_check
      _
    $region15: #{tpu_custom_call.1} parent=1 // pred_check_branch
      %36 = sbr.rel (0) target = $region17
    $region16: #{tpu_custom_call.1} parent=1 // pred_region
      %37 = dma.done [#allocation7], 1024
    $region17: #{tpu_custom_call.1} parent=1 // pred_fallthru
      _
    %s39 = smul.u32 0, 8
    %p40 = scmp.eq.s32.totalorder 0, 0
    // Predicated region
    $region18: #{tpu_custom_call.1} parent=1 // pred_check
      %p41 = pneg %p40
    $region19: #{tpu_custom_call.1} parent=1 // pred_check_branch
      %43 = sbr.rel (%p41) target = $region21
    $region20: #{tpu_custom_call.1} parent=1 // pred_region
      %44 = vst [vmem:[#allocation2] sm:$0xff] 0.0
    $region21: #{tpu_custom_call.1} parent=1 // pred_fallthru
      _
    %v45 = vld [vmem:[#allocation3] sm:$0x1]
    %v46 = vlaneseq
    %v47 = vshrl.u32 %v46, 7
    %v48 = vstv %s39
    %v49 = vadd.s32 %v47, %v48
    %v50 = vlaneseq
    %v51 = vshrl.u32 %v50, 7
    %v52 = vsub.s32 0, %v51
    %v53 = vrot.slane %v45, %v52
    %vm54 = vcmp.eq.s32.totalorder %v49, %v53
    %v55 = vld [vmem:[#allocation6] sm:$0xf]
    %v56 = vld [vmem:[#allocation6 + $0x4] sm:$0xf]
    %v57 = vld [vmem:[#allocation6 + $0x8] sm:$0xf]
    %v58 = vld [vmem:[#allocation6 + $0xc] sm:$0xf]
    %v59 = vld [vmem:[#allocation6 + $0x10] sm:$0xf]
    %v60 = vld [vmem:[#allocation6 + $0x14] sm:$0xf]
    %v61 = vld [vmem:[#allocation6 + $0x18] sm:$0xf]
    %v62 = vld [vmem:[#allocation6 + $0x1c] sm:$0xf]
    %v63 = vld [vmem:[#allocation6 + $0x20] sm:$0xf]
    %v64 = vld [vmem:[#allocation6 + $0x24] sm:$0xf]
    %v65 = vld [vmem:[#allocation6 + $0x28] sm:$0xf]
    %v66 = vld [vmem:[#allocation6 + $0x2c] sm:$0xf]
    %v67 = vld [vmem:[#allocation6 + $0x30] sm:$0xf]
    %v68 = vld [vmem:[#allocation6 + $0x34] sm:$0xf]
    %v69 = vld [vmem:[#allocation6 + $0x38] sm:$0xf]
    %v70 = vld [vmem:[#allocation6 + $0x3c] sm:$0xf]
    %v71 = vld [vmem:[#allocation2] sm:$0xff]
    %v72 = vsel %vm54, 1, 0
    %v73 = vcvt.s32.f32 %v72
    %v74 = vpack.c.bf16 %v73, %v73
    %v91 = vunpack.c.l.b16 %v55
    %v92 = vunpack.c.l.b16 %v56
    %v93 = vunpack.c.l.b16 %v57
    %v94 = vunpack.c.l.b16 %v58
    %v95 = vunpack.c.l.b16 %v59
    %v96 = vunpack.c.l.b16 %v60
    %v97 = vunpack.c.l.b16 %v61
    %v98 = vunpack.c.l.b16 %v62
    %v99 = vunpack.c.l.b16 %v63
    %v100 = vunpack.c.l.b16 %v64
    %v101 = vunpack.c.l.b16 %v65
    %v102 = vunpack.c.l.b16 %v66
    %v103 = vunpack.c.l.b16 %v67
    %v104 = vunpack.c.l.b16 %v68
    %v105 = vunpack.c.l.b16 %v69
    %v106 = vunpack.c.l.b16 %v70
    %v107 = vpack.c.b16 %v92, %v91
    %v108 = vpack.c.b16 %v94, %v93
    %v109 = vpack.c.b16 %v96, %v95
    %v110 = vpack.c.b16 %v98, %v97
    %v111 = vpack.c.b16 %v100, %v99
    %v112 = vpack.c.b16 %v102, %v101
    %v113 = vpack.c.b16 %v104, %v103
    %v114 = vpack.c.b16 %v106, %v105
    %123 = vmatprep.subr.bf16.mxu0 0
    %124 = vmatpush1.bf16.msra.mxu0 %v107
    %125 = vmatprep.subr.bf16.mxu0 0
    %126 = vmatpush1.bf16.msra.mxu0 %v108
    %127 = vmatprep.subr.bf16.mxu0 0
    %128 = vmatpush1.bf16.msra.mxu0 %v109
    %129 = vmatprep.subr.bf16.mxu0 0
    %130 = vmatpush1.bf16.msra.mxu0 %v110
    %131 = vmatprep.subr.bf16.mxu0 0
    %132 = vmatpush1.bf16.msra.mxu0 %v111
    %133 = vmatprep.subr.bf16.mxu0 0
    %134 = vmatpush1.bf16.msra.mxu0 %v112
    %135 = vmatprep.subr.bf16.mxu0 0
    %136 = vmatpush1.bf16.msra.mxu0 %v113
    %137 = vmatprep.subr.bf16.mxu0 0
    %138 = vmatpush1.bf16.msra.mxu0 %v114
    %139 = vmatprep.subr.bf16.mxu0 0
    %140 = vmatpush1.bf16.msra.mxu0 0
    %141 = vmatprep.subr.bf16.mxu0 0
    %142 = vmatpush1.bf16.msra.mxu0 0
    %143 = vmatprep.subr.bf16.mxu0 0
    %144 = vmatpush1.bf16.msra.mxu0 0
    %145 = vmatprep.subr.bf16.mxu0 0
    %146 = vmatpush1.bf16.msra.mxu0 0
    %147 = vmatprep.subr.bf16.mxu0 0
    %148 = vmatpush1.bf16.msra.mxu0 0
    %149 = vmatprep.subr.bf16.mxu0 0
    %150 = vmatpush1.bf16.msra.mxu0 0
    %151 = vmatprep.subr.bf16.mxu0 0
    %152 = vmatpush1.bf16.msra.mxu0 0
    %153 = vmatprep.subr.bf16.mxu0 0
    %154 = vmatpush1.bf16.msra.mxu0 0
    %155 = vmatprep.mubr.bf16.mxu0 0
    %156 = vmatmul.mubr.bf16.gmra.mrb[0].mxu0 %v74
    %v157 = vpop.f32.mrb[0].mxu0
    %v158 = vadd.f32 0.0, %v157
    %v159 = vpop.f32.mrb[0].mxu0
    %v160 = vpop.f32.mrb[0].mxu0
    %v161 = vpop.f32.mrb[0].mxu0
    %162 = vdwg.mxu0
    %v163 = vadd.f32 %v71, %v158
    %164 = vst [vmem:[#allocation2] sm:$0xff] %v163
    // Predicated region
    $region22: #{tpu_custom_call.1} parent=1 // pred_check
      %p165 = pneg %p40
    $region23: #{tpu_custom_call.1} parent=1 // pred_check_branch
      %167 = sbr.rel (%p165) target = $region25
    $region24: #{tpu_custom_call.1} parent=1 // pred_region
      %v168 = vld [vmem:[#allocation2] sm:$0xff]
      %v169 = vlaneseq
      %v170 = vand.u32 %v169, 127
      %vm171 = vcmp.eq.s32.totalorder %v170, 32
      %v172 = vsel %vm171, %v168, 0.0
      %173 = vadd.xlane.f32.xlu0 %v172
      %v174 = vpop.xlane.xlu0 %173
      %v175 = vmax.f32 %v174, 1.0
      %v176 = vrcp.pop %v175
      %v177 = vmul.f32 %v168, %v176
      %178 = vst [vmem:[#allocation8] sm:$0xff] %v177
    $region25: #{tpu_custom_call.1} parent=1 // pred_fallthru
      _
    // Predicated region
    $region26: #{tpu_custom_call.1} parent=1 // pred_check
      _
    $region27: #{tpu_custom_call.1} parent=1 // pred_check_branch
      %180 = sbr.rel (0) target = $region29
    $region28: #{tpu_custom_call.1} parent=1 // pred_region
      %s182 = ssub.s32 128, 128
      %183 = vsyncadd [#allocation5], %s182
      %s185 = sshll.u32 [#allocation8], 4
      %s186 = int_to_ptr.vmem [resolvable:$true] %s185
      %188 = dma.vmem_to_hbm [thread:$0]  %s186, 128, %s2, [#allocation5]
    $region29: #{tpu_custom_call.1} parent=1 // pred_fallthru
      _
    // Predicated region
    $region30: #{tpu_custom_call.1} parent=1 // pred_check
      _
    $region31: #{tpu_custom_call.1} parent=1 // pred_check_branch
      %190 = sbr.rel (0) target = $region33
    $region32: #{tpu_custom_call.1} parent=1 // pred_region
      %191 = dma.done [#allocation5], 128
    $region33: #{tpu_custom_call.1} parent=1 // pred_fallthru
      _
    %192 = vsyncpa [#allocation4], 1
    %193 = vsyncpa [#allocation7], 1
    %194 = vsyncpa [#allocation5], 1

</llo_original>
